<compile_context>
chip_gen: v7x
topology: tpu7x:2x2x1
jax: 0.10.0
libtpu: 0.0.40
codegen_flags: <defaults>
</compile_context>

<pallas_src>
import functools

import jax
import jax.numpy as jnp
from jax.experimental import pallas as pl
from jax.experimental.pallas import tpu as pltpu


# ----------------------------- kernels ------------------------------------- #

def _group_corr_fused_kernel(feat_ref, out_ref, *, N, G, Cg):
    # feat_ref : (N, C, T)   all views for this HW tile (single DMA stream).
    # out_ref  : (N-1, G, T) group correlation for every source view.
    for n in range(N - 1):
        rows = []
        for g in range(G):
            ref_g = feat_ref[0, g * Cg:(g + 1) * Cg, :].astype(jnp.float32)
            src_g = feat_ref[n + 1, g * Cg:(g + 1) * Cg, :].astype(jnp.float32)
            # Per-group product + exact f32 sublane reduction (VPU/XLU only):
            rows.append(jnp.sum(ref_g * src_g, axis=0, keepdims=True))   # (1, T)
        # Single dense (G, T) store per source view (no masked per-row vst).
        out_ref[n] = jnp.concatenate(rows, axis=0).astype(out_ref.dtype)


def _group_corr_pair_kernel(ref_ref, src_ref, out_ref, *, G, Cg):
    # Fallback (large N): ref_ref/src_ref: (1, C, T); out_ref: (1, G, T).
    rows = []
    for g in range(G):
        ref_g = ref_ref[0, g * Cg:(g + 1) * Cg, :].astype(jnp.float32)
        src_g = src_ref[0, g * Cg:(g + 1) * Cg, :].astype(jnp.float32)
        rows.append(jnp.sum(ref_g * src_g, axis=0, keepdims=True))        # (1, T)
    out_ref[0] = jnp.concatenate(rows, axis=0).astype(out_ref.dtype)


# ----------------------------- sizing helpers ------------------------------ #

def _vmem_capacity_bytes():
    try:
        return int(pltpu.get_tpu_info().vmem_capacity_bytes)
    except Exception:
        return 64 * 1024 * 1024   # conservative (v7x per-TC) fallback


def _round_up(x, m):
    return -(-x // m) * m


def _pick_hw_tile(HW, bytes_per_lane, budget, *, split_full_tiles=True):
    """Largest lane tile (multiple of 128, or full extent) fitting `budget`.

    If the whole HW extent fits in one block and HW is large enough, split it
    into two tiles so a v7x megacore has >= 2 parallel grid points (the extra
    ~0.35 us step is negligible on single-core chips).
    """
    t = budget // max(bytes_per_lane, 1)
    t = max((t // 128) * 128, 128)
    if HW <= t:
        if split_full_tiles and HW > 256:
            half = _round_up(-(-HW // 2), 128)
            if half < HW:
                return half
        return HW                  # full-extent block is always layout-legal
    return t


# ----------------------------- wrapper -------------------------------------- #

def group_corr_feature_scorer(features: jax.Array, G: int, *,
                              lane_tile: int | None = None,
                              mode: str = "auto") -> jax.Array:
    """features: (N, C, H, W). Returns (N-1, G, H, W) in the input dtype.

    lane_tile: test-only override of the HW tile width (multiple of 128).
    mode: "auto" (default), "fused", or "pair".
    """
    N, C, H, W = features.shape
    assert N >= 2, "need at least one source view"
    assert C % G == 0, "C must be divisible by G"
    Cg = C // G
    HW = H * W

    feats = features.reshape(N, C, HW)     # metadata-only reshape, no transpose
    itemsize = features.dtype.itemsize

    # VMEM budget / scoped limit derived from the actual chip (v7x has only
    # 64 MiB per TC; v5e/v6e have 128 MiB).  Leave headroom above the block
    # budget for Mosaic internal scratch and the f32 temporaries.
    cap = _vmem_capacity_bytes()
    block_budget = max(min(int(0.45 * cap), 48 * 1024 * 1024), 8 * 1024 * 1024)
    vmem_limit = max(min(int(0.70 * cap), 96 * 1024 * 1024), 32 * 1024 * 1024)

    # Per-lane byte accounting: double-buffered HBM-facing blocks at input
    # itemsize, plus the in-kernel f32 upcast/product temporaries (review item).
    temps_per_lane = 4 * (3 * Cg + 2 * G)
    fused_bpl = itemsize * (2 * N * C + 2 * (N - 1) * G) + temps_per_lane
    pair_bpl = itemsize * (2 * 2 * C + 2 * G) + temps_per_lane

    if mode == "fused":
        use_fused = True
    elif mode == "pair":
        use_fused = False
    else:
        # Fold the view axis into the block when N is modest and the fused
        # block still allows a reasonably wide lane tile.
        use_fused = (N - 1) <= 32 and (block_budget // fused_bpl) >= min(HW, 512)

    cost = pl.CostEstimate(
        flops=2 * (N - 1) * C * HW,
        transcendentals=0,
        bytes_accessed=itemsize * (N * C * HW + (N - 1) * G * HW),
    )

    def _resolve_tile(bpl):
        if lane_tile is not None:
            if lane_tile >= HW:
                return HW
            return max((lane_tile // 128) * 128, 128)
        return _pick_hw_tile(HW, bpl, block_budget)

    if use_fused:
        T = _resolve_tile(fused_bpl)
        num_tiles = pl.cdiv(HW, T)
        kernel = functools.partial(_group_corr_fused_kernel, N=N, G=G, Cg=Cg)
        out = pl.pallas_call(
            kernel,
            out_shape=jax.ShapeDtypeStruct((N - 1, G, HW), features.dtype),
            grid_spec=pltpu.PrefetchScalarGridSpec(
                num_scalar_prefetch=0,
                grid=(num_tiles,),
                in_specs=[pl.BlockSpec((N, C, T), lambda t: (0, 0, t))],
                out_specs=pl.BlockSpec((N - 1, G, T), lambda t: (0, 0, t)),
            ),
            compiler_params=pltpu.CompilerParams(
                dimension_semantics=("parallel",),
                vmem_limit_bytes=vmem_limit,
            ),
            cost_estimate=cost,
        )(feats)
    else:
        T = _resolve_tile(pair_bpl)
        num_tiles = pl.cdiv(HW, T)
        kernel = functools.partial(_group_corr_pair_kernel, G=G, Cg=Cg)
        out = pl.pallas_call(
            kernel,
            out_shape=jax.ShapeDtypeStruct((N - 1, G, HW), features.dtype),
            grid_spec=pltpu.PrefetchScalarGridSpec(
                num_scalar_prefetch=0,
                # HW-tile axis leading, source-view axis innermost so the ref
                # block index only changes per HW tile (stays resident).
                grid=(num_tiles, N - 1),
                in_specs=[
                    pl.BlockSpec((1, C, T), lambda t, n: (0, 0, t)),      # ref
                    pl.BlockSpec((1, C, T), lambda t, n: (n + 1, 0, t)),  # src
                ],
                out_specs=pl.BlockSpec((1, G, T), lambda t, n: (n, 0, t)),
            ),
            compiler_params=pltpu.CompilerParams(
                # Both axes are independent -> both "parallel" (megacore-safe
                # even when num_tiles == 1).
                dimension_semantics=("parallel", "parallel"),
                vmem_limit_bytes=vmem_limit,
            ),
            cost_estimate=cost,
        )(feats, feats)   # same HBM buffer twice; ref vs src chosen by index_maps

    return out.reshape(N - 1, G, H, W)


# ----------------------------- reference & test ----------------------------- #

def _reference(features: jax.Array, G: int) -> jax.Array:
    """Exact-f32 pure-JAX reference mirroring the PyTorch forward."""
    N, C, H, W = features.shape
    f = features.reshape(N, G, C // G, H, W).astype(jnp.float32)
    return jnp.sum(f[:1] * f[1:], axis=2).astype(features.dtype)   # (N-1, G, H, W)


if __name__ == "__main__":
    key = jax.random.PRNGKey(0)
    k1, k2 = jax.random.split(key)

    # Case 1: main small shape, auto path (fused single-stream kernel).
    G = 4                                   # hparams.feature_scorer_channel_scale
    N, C, H, W = 3, 8, 16, 16               # C divisible by G
    feats = jax.random.normal(k1, (N, C, H, W), dtype=jnp.float32)
    out = jax.block_until_ready(group_corr_feature_scorer(feats, G))
    ref = _reference(feats, G)
    assert out.shape == (N - 1, G, H, W), out.shape
    assert jnp.allclose(out, ref, atol=1e-5, rtol=1e-5), "fused mismatch"

    # Case 2: force the two-axis pair kernel (large-N fallback path).
    out2 = jax.block_until_ready(group_corr_feature_scorer(feats, G, mode="pair"))
    assert jnp.allclose(out2, ref, atol=1e-5, rtol=1e-5), "pair mismatch"

    # Case 3: ragged last HW tile (HW = 272, forced T = 128) on the fused path:
    # exercises Pallas boundary padding / masked writeback of the partial tile.
    G3 = 2
    N3, C3, H3, W3 = 2, 4, 16, 17
    feats3 = jax.random.normal(k2, (N3, C3, H3, W3), dtype=jnp.float32)
    out3 = jax.block_until_ready(
        group_corr_feature_scorer(feats3, G3, lane_tile=128))
    ref3 = _reference(feats3, G3)
    assert out3.shape == (N3 - 1, G3, H3, W3), out3.shape
    assert jnp.allclose(out3, ref3, atol=1e-5, rtol=1e-5), "ragged-tile mismatch"

    print("KERNEL_OK")
</pallas_src>

<mosaic_0001>
module attributes {stable_mosaic.version = 11 : i64} {
  func.func @_group_corr_fused_kernel(%arg0: i32, %arg1: memref<3x8x256xf32, #tpu.memory_space<vmem>>, %arg2: memref<2x4x256xf32, #tpu.memory_space<vmem>>) attributes {dimension_semantics = [#tpu.dimension_semantics<parallel>], iteration_bounds = array<i64: 1>, scalar_prefetch = 0 : i64, scratch_operands = 0 : i64, tpu.core_type = #tpu.core_type<tc>, window_params = [{transform_indices = @transform_0, window_bounds = array<i64: 3, 8, 256>}, {transform_indices = @transform_1, window_bounds = array<i64: 2, 4, 256>}]} {
    %c0 = arith.constant 0 : index
    %c0_0 = arith.constant 0 : index
    %c0_1 = arith.constant 0 : index
    %0 = vector.load %arg1[%c0, %c0_0, %c0_1] : memref<3x8x256xf32, #tpu.memory_space<vmem>>, vector<1x2x256xf32>
    %1 = vector.shape_cast %0 : vector<1x2x256xf32> to vector<2x256xf32>
    %c1 = arith.constant 1 : index
    %c0_2 = arith.constant 0 : index
    %c0_3 = arith.constant 0 : index
    %2 = vector.load %arg1[%c1, %c0_2, %c0_3] : memref<3x8x256xf32, #tpu.memory_space<vmem>>, vector<1x2x256xf32>
    %3 = vector.shape_cast %2 : vector<1x2x256xf32> to vector<2x256xf32>
    %4 = arith.mulf %1, %3 : vector<2x256xf32>
    %cst = arith.constant dense<0.000000e+00> : vector<256xf32>
    %5 = vector.multi_reduction <add>, %4, %cst [0] : vector<2x256xf32> to vector<256xf32>
    %6 = vector.shape_cast %5 : vector<256xf32> to vector<1x256xf32>
    %c0_4 = arith.constant 0 : index
    %c2 = arith.constant 2 : index
    %c0_5 = arith.constant 0 : index
    %7 = vector.load %arg1[%c0_4, %c2, %c0_5] : memref<3x8x256xf32, #tpu.memory_space<vmem>>, vector<1x2x256xf32>
    %8 = vector.shape_cast %7 : vector<1x2x256xf32> to vector<2x256xf32>
    %c1_6 = arith.constant 1 : index
    %c2_7 = arith.constant 2 : index
    %c0_8 = arith.constant 0 : index
    %9 = vector.load %arg1[%c1_6, %c2_7, %c0_8] : memref<3x8x256xf32, #tpu.memory_space<vmem>>, vector<1x2x256xf32>
    %10 = vector.shape_cast %9 : vector<1x2x256xf32> to vector<2x256xf32>
    %11 = arith.mulf %8, %10 : vector<2x256xf32>
    %cst_9 = arith.constant dense<0.000000e+00> : vector<256xf32>
    %12 = vector.multi_reduction <add>, %11, %cst_9 [0] : vector<2x256xf32> to vector<256xf32>
    %13 = vector.shape_cast %12 : vector<256xf32> to vector<1x256xf32>
    %c0_10 = arith.constant 0 : index
    %c4 = arith.constant 4 : index
    %c0_11 = arith.constant 0 : index
    %14 = vector.load %arg1[%c0_10, %c4, %c0_11] : memref<3x8x256xf32, #tpu.memory_space<vmem>>, vector<1x2x256xf32>
    %15 = vector.shape_cast %14 : vector<1x2x256xf32> to vector<2x256xf32>
    %c1_12 = arith.constant 1 : index
    %c4_13 = arith.constant 4 : index
    %c0_14 = arith.constant 0 : index
    %16 = vector.load %arg1[%c1_12, %c4_13, %c0_14] : memref<3x8x256xf32, #tpu.memory_space<vmem>>, vector<1x2x256xf32>
    %17 = vector.shape_cast %16 : vector<1x2x256xf32> to vector<2x256xf32>
    %18 = arith.mulf %15, %17 : vector<2x256xf32>
    %cst_15 = arith.constant dense<0.000000e+00> : vector<256xf32>
    %19 = vector.multi_reduction <add>, %18, %cst_15 [0] : vector<2x256xf32> to vector<256xf32>
    %20 = vector.shape_cast %19 : vector<256xf32> to vector<1x256xf32>
    %c0_16 = arith.constant 0 : index
    %c6 = arith.constant 6 : index
    %c0_17 = arith.constant 0 : index
    %21 = vector.load %arg1[%c0_16, %c6, %c0_17] : memref<3x8x256xf32, #tpu.memory_space<vmem>>, vector<1x2x256xf32>
    %22 = vector.shape_cast %21 : vector<1x2x256xf32> to vector<2x256xf32>
    %c1_18 = arith.constant 1 : index
    %c6_19 = arith.constant 6 : index
    %c0_20 = arith.constant 0 : index
    %23 = vector.load %arg1[%c1_18, %c6_19, %c0_20] : memref<3x8x256xf32, #tpu.memory_space<vmem>>, vector<1x2x256xf32>
    %24 = vector.shape_cast %23 : vector<1x2x256xf32> to vector<2x256xf32>
    %25 = arith.mulf %22, %24 : vector<2x256xf32>
    %cst_21 = arith.constant dense<0.000000e+00> : vector<256xf32>
    %26 = vector.multi_reduction <add>, %25, %cst_21 [0] : vector<2x256xf32> to vector<256xf32>
    %27 = vector.shape_cast %26 : vector<256xf32> to vector<1x256xf32>
    %28 = tpu.concatenate %6, %13, %20, %27 in 0 : vector<1x256xf32>, vector<1x256xf32>, vector<1x256xf32>, vector<1x256xf32> -> vector<4x256xf32>
    %c0_22 = arith.constant 0 : index
    %c0_23 = arith.constant 0 : index
    %c0_24 = arith.constant 0 : index
    %29 = vector.load %arg2[%c0_22, %c0_23, %c0_24] : memref<2x4x256xf32, #tpu.memory_space<vmem>>, vector<1x4x256xf32>
    %30 = vector.shape_cast %29 : vector<1x4x256xf32> to vector<4x256xf32>
    %31 = vector.shape_cast %28 : vector<4x256xf32> to vector<1x4x256xf32>
    tpu.vector_store %arg2[%c0_22, %c0_23, %c0_24], %31 {strides = array<i32>} : memref<2x4x256xf32, #tpu.memory_space<vmem>>, vector<1x4x256xf32>,
    %c0_25 = arith.constant 0 : index
    %c0_26 = arith.constant 0 : index
    %c0_27 = arith.constant 0 : index
    %32 = vector.load %arg1[%c0_25, %c0_26, %c0_27] : memref<3x8x256xf32, #tpu.memory_space<vmem>>, vector<1x2x256xf32>
    %33 = vector.shape_cast %32 : vector<1x2x256xf32> to vector<2x256xf32>
    %c2_28 = arith.constant 2 : index
    %c0_29 = arith.constant 0 : index
    %c0_30 = arith.constant 0 : index
    %34 = vector.load %arg1[%c2_28, %c0_29, %c0_30] : memref<3x8x256xf32, #tpu.memory_space<vmem>>, vector<1x2x256xf32>
    %35 = vector.shape_cast %34 : vector<1x2x256xf32> to vector<2x256xf32>
    %36 = arith.mulf %33, %35 : vector<2x256xf32>
    %cst_31 = arith.constant dense<0.000000e+00> : vector<256xf32>
    %37 = vector.multi_reduction <add>, %36, %cst_31 [0] : vector<2x256xf32> to vector<256xf32>
    %38 = vector.shape_cast %37 : vector<256xf32> to vector<1x256xf32>
    %c0_32 = arith.constant 0 : index
    %c2_33 = arith.constant 2 : index
    %c0_34 = arith.constant 0 : index
    %39 = vector.load %arg1[%c0_32, %c2_33, %c0_34] : memref<3x8x256xf32, #tpu.memory_space<vmem>>, vector<1x2x256xf32>
    %40 = vector.shape_cast %39 : vector<1x2x256xf32> to vector<2x256xf32>
    %c2_35 = arith.constant 2 : index
    %c2_36 = arith.constant 2 : index
    %c0_37 = arith.constant 0 : index
    %41 = vector.load %arg1[%c2_35, %c2_36, %c0_37] : memref<3x8x256xf32, #tpu.memory_space<vmem>>, vector<1x2x256xf32>
    %42 = vector.shape_cast %41 : vector<1x2x256xf32> to vector<2x256xf32>
    %43 = arith.mulf %40, %42 : vector<2x256xf32>
    %cst_38 = arith.constant dense<0.000000e+00> : vector<256xf32>
    %44 = vector.multi_reduction <add>, %43, %cst_38 [0] : vector<2x256xf32> to vector<256xf32>
    %45 = vector.shape_cast %44 : vector<256xf32> to vector<1x256xf32>
    %c0_39 = arith.constant 0 : index
    %c4_40 = arith.constant 4 : index
    %c0_41 = arith.constant 0 : index
    %46 = vector.load %arg1[%c0_39, %c4_40, %c0_41] : memref<3x8x256xf32, #tpu.memory_space<vmem>>, vector<1x2x256xf32>
    %47 = vector.shape_cast %46 : vector<1x2x256xf32> to vector<2x256xf32>
    %c2_42 = arith.constant 2 : index
    %c4_43 = arith.constant 4 : index
    %c0_44 = arith.constant 0 : index
    %48 = vector.load %arg1[%c2_42, %c4_43, %c0_44] : memref<3x8x256xf32, #tpu.memory_space<vmem>>, vector<1x2x256xf32>
    %49 = vector.shape_cast %48 : vector<1x2x256xf32> to vector<2x256xf32>
    %50 = arith.mulf %47, %49 : vector<2x256xf32>
    %cst_45 = arith.constant dense<0.000000e+00> : vector<256xf32>
    %51 = vector.multi_reduction <add>, %50, %cst_45 [0] : vector<2x256xf32> to vector<256xf32>
    %52 = vector.shape_cast %51 : vector<256xf32> to vector<1x256xf32>
    %c0_46 = arith.constant 0 : index
    %c6_47 = arith.constant 6 : index
    %c0_48 = arith.constant 0 : index
    %53 = vector.load %arg1[%c0_46, %c6_47, %c0_48] : memref<3x8x256xf32, #tpu.memory_space<vmem>>, vector<1x2x256xf32>
    %54 = vector.shape_cast %53 : vector<1x2x256xf32> to vector<2x256xf32>
    %c2_49 = arith.constant 2 : index
    %c6_50 = arith.constant 6 : index
    %c0_51 = arith.constant 0 : index
    %55 = vector.load %arg1[%c2_49, %c6_50, %c0_51] : memref<3x8x256xf32, #tpu.memory_space<vmem>>, vector<1x2x256xf32>
    %56 = vector.shape_cast %55 : vector<1x2x256xf32> to vector<2x256xf32>
    %57 = arith.mulf %54, %56 : vector<2x256xf32>
    %cst_52 = arith.constant dense<0.000000e+00> : vector<256xf32>
    %58 = vector.multi_reduction <add>, %57, %cst_52 [0] : vector<2x256xf32> to vector<256xf32>
    %59 = vector.shape_cast %58 : vector<256xf32> to vector<1x256xf32>
    %60 = tpu.concatenate %38, %45, %52, %59 in 0 : vector<1x256xf32>, vector<1x256xf32>, vector<1x256xf32>, vector<1x256xf32> -> vector<4x256xf32>
    %c1_53 = arith.constant 1 : index
    %c0_54 = arith.constant 0 : index
    %c0_55 = arith.constant 0 : index
    %61 = vector.load %arg2[%c1_53, %c0_54, %c0_55] : memref<2x4x256xf32, #tpu.memory_space<vmem>>, vector<1x4x256xf32>
    %62 = vector.shape_cast %61 : vector<1x4x256xf32> to vector<4x256xf32>
    %63 = vector.shape_cast %60 : vector<4x256xf32> to vector<1x4x256xf32>
    tpu.vector_store %arg2[%c1_53, %c0_54, %c0_55], %63 {strides = array<i32>} : memref<2x4x256xf32, #tpu.memory_space<vmem>>, vector<1x4x256xf32>,
    return
  }
  func.func @transform_0(%arg0: i32) -> (i32, i32, i32) {
    %c0_i32 = arith.constant 0 : i32
    %c0_i32_0 = arith.constant 0 : i32
    %c0_i32_1 = arith.constant 0 : i32
    return %c0_i32, %c0_i32_0, %arg0 : i32, i32, i32
  }
  func.func @transform_1(%arg0: i32) -> (i32, i32, i32) {
    %c0_i32 = arith.constant 0 : i32
    %c0_i32_0 = arith.constant 0 : i32
    %c0_i32_1 = arith.constant 0 : i32
    return %c0_i32, %c0_i32_0, %arg0 : i32, i32, i32
  }
}

</mosaic_0001>

<llo_original>
// kernel: tpu_custom_call.1
$region0: #{tpu_custom_call.1}
  #allocation0 [shape = 'u32[]', space=smem, size = 0x4, offset = 0x4, fixed_abs, tag = 'smem constant byte address 0x4 - core index']
  #allocation1 [shape = 'u32[144,128]{1,0:T(1,128)}', space=vmem, size = 0x12000, scoped, tag = 'internal scratch']
  %s0 = inlined_call_operand.hbm [shape: f32[3,8,256], index: 0, kind: input, shape index: {}]
  %s1 = inlined_call_operand.hbm [shape: f32[2,4,256], index: 1, kind: output, shape index: {}]
  %s2 = sld [smem:[#allocation0]]
  $region18: #{tpu_custom_call.1} parent=0
    _
  %s4 = ssub.s32 1, %s2
  %s5 = scalar_select 0, %s4, %s2
  $region1: #{tpu_custom_call.1} parent=0
    #allocation2 [shape = 'u8[24576]{0}', space=vmem, size = 0x6000, scoped, tag = 'input window, operand 0, single buffered']
    #allocation3 [shape = 's32[1]{0}', space=sflag, size = 0x4, scoped, tag = 'scoped memory for tpu_custom_call.1']
    #allocation4 [shape = 's32[1]{0}', space=sflag, size = 0x4, scoped, tag = 'scoped memory for tpu_custom_call.1']
    #allocation5 [shape = 'u8[8192]{0}', space=vmem, size = 0x2000, scoped, tag = 'output window, operand 0, single buffered']
    %6 = vsyncpa [#allocation3], 0
    %7 = vsyncpa [#allocation4], 0
    // Predicated region
    $region2: #{tpu_custom_call.1} parent=1 // pred_check
      _
    $region3: #{tpu_custom_call.1} parent=1 // pred_check_branch
      %9 = sbr.rel (0) target = $region5
    $region4: #{tpu_custom_call.1} parent=1 // pred_region
      %s11 = ssub.s32 768, 768
      %12 = vsyncadd [#allocation3], %s11
      %s13 = sshll.u32 [#allocation2], 4
      %s14 = int_to_ptr.vmem [resolvable:$true] %s13
      %19 = dma.hbm_to_vmem [thread:$0]  %s0, 768, %s14, [#allocation3], 256, 256, 16
    $region5: #{tpu_custom_call.1} parent=1 // pred_fallthru
      _
    // Predicated region
    $region6: #{tpu_custom_call.1} parent=1 // pred_check
      _
    $region7: #{tpu_custom_call.1} parent=1 // pred_check_branch
      %21 = sbr.rel (0) target = $region9
    $region8: #{tpu_custom_call.1} parent=1 // pred_region
      %22 = dma.done [#allocation3], 768
    $region9: #{tpu_custom_call.1} parent=1 // pred_fallthru
      _
    %v23 = vld [vmem:[#allocation2] sm:$0x3]
    %v24 = vld [vmem:[#allocation2 + $0x8] sm:$0x3]
    %s25 = scalar_lea.vmem [#allocation2], 16
    %v26 = vld [vmem:[%s25] sm:$0x3]
    %v27 = vld [vmem:[%s25 + $0x8] sm:$0x3]
    %v28 = vmul.f32 %v23, %v26
    %v29 = vmul.f32 %v24, %v27
    %vm30 = vcmask 1041408
    %v31 = vsel %vm30, %v28, 0.0
    %v32 = vrot.slane %v31, 4
    %v33 = vadd.f32 %v31, %v32
    %v34 = vrot.slane %v33, 2
    %v35 = vadd.f32 %v33, %v34
    %v36 = vrot.slane %v35, 1
    %v37 = vadd.f32 %v35, %v36
    %v38 = vsel %vm30, %v29, 0.0
    %v39 = vrot.slane %v38, 4
    %v40 = vadd.f32 %v38, %v39
    %v41 = vrot.slane %v40, 2
    %v42 = vadd.f32 %v40, %v41
    %v43 = vrot.slane %v42, 1
    %v44 = vadd.f32 %v42, %v43
    %v45 = vld [vmem:[#allocation2] sm:$0xc]
    %v46 = vld [vmem:[#allocation2 + $0x8] sm:$0xc]
    %v47 = vld [vmem:[%s25] sm:$0xc]
    %v48 = vld [vmem:[%s25 + $0x8] sm:$0xc]
    %v49 = vmul.f32 %v45, %v47
    %v50 = vmul.f32 %v46, %v48
    %v53 = vrot.slane %v49, 2
    %v54 = vrot.slane %v50, 2
    %v57 = vsel %vm30, %v53, 0.0
    %v58 = vrot.slane %v57, 4
    %v59 = vadd.f32 %v57, %v58
    %v60 = vrot.slane %v59, 2
    %v61 = vadd.f32 %v59, %v60
    %v62 = vrot.slane %v61, 1
    %v63 = vadd.f32 %v61, %v62
    %v64 = vsel %vm30, %v54, 0.0
    %v65 = vrot.slane %v64, 4
    %v66 = vadd.f32 %v64, %v65
    %v67 = vrot.slane %v66, 2
    %v68 = vadd.f32 %v66, %v67
    %v69 = vrot.slane %v68, 1
    %v70 = vadd.f32 %v68, %v69
    %v71 = vld [vmem:[#allocation2] sm:$0x30]
    %v72 = vld [vmem:[#allocation2 + $0x8] sm:$0x30]
    %v73 = vld [vmem:[%s25] sm:$0x30]
    %v74 = vld [vmem:[%s25 + $0x8] sm:$0x30]
    %v75 = vmul.f32 %v71, %v73
    %v76 = vmul.f32 %v72, %v74
    %v79 = vrot.slane %v75, 4
    %v80 = vrot.slane %v76, 4
    %v83 = vsel %vm30, %v79, 0.0
    %v84 = vrot.slane %v83, 4
    %v85 = vadd.f32 %v83, %v84
    %v86 = vrot.slane %v85, 2
    %v87 = vadd.f32 %v85, %v86
    %v88 = vrot.slane %v87, 1
    %v89 = vadd.f32 %v87, %v88
    %v90 = vsel %vm30, %v80, 0.0
    %v91 = vrot.slane %v90, 4
    %v92 = vadd.f32 %v90, %v91
    %v93 = vrot.slane %v92, 2
    %v94 = vadd.f32 %v92, %v93
    %v95 = vrot.slane %v94, 1
    %v96 = vadd.f32 %v94, %v95
    %v97 = vld [vmem:[#allocation2] sm:$0xc0]
    %v98 = vld [vmem:[#allocation2 + $0x8] sm:$0xc0]
    %v99 = vld [vmem:[%s25] sm:$0xc0]
    %v100 = vld [vmem:[%s25 + $0x8] sm:$0xc0]
    %v101 = vmul.f32 %v97, %v99
    %v102 = vmul.f32 %v98, %v100
    %v105 = vrot.slane %v101, 6
    %v106 = vrot.slane %v102, 6
    %v109 = vsel %vm30, %v105, 0.0
    %v110 = vrot.slane %v109, 4
    %v111 = vadd.f32 %v109, %v110
    %v112 = vrot.slane %v111, 2
    %v113 = vadd.f32 %v111, %v112
    %v114 = vrot.slane %v113, 1
    %v115 = vadd.f32 %v113, %v114
    %v116 = vsel %vm30, %v106, 0.0
    %v117 = vrot.slane %v116, 4
    %v118 = vadd.f32 %v116, %v117
    %v119 = vrot.slane %v118, 2
    %v120 = vadd.f32 %v118, %v119
    %v121 = vrot.slane %v120, 1
    %v122 = vadd.f32 %v120, %v121
    %vm123 = vcmask 1040384
    %v124 = vsel %vm123, %v37, %v63
    %v125 = vsel %vm123, %v44, %v70
    %v126 = vsel %vm30, %v124, %v89
    %v127 = vsel %vm30, %v125, %v96
    %vm128 = vcmask 1042432
    %v129 = vsel %vm128, %v126, %v115
    %v130 = vsel %vm128, %v127, %v122
    %v133 = vcombine.low %v129, %v130
    %135 = vst [vmem:[#allocation5] sm:$0xff] %v133
    %v136 = vld [vmem:[#allocation2] sm:$0x3]
    %v137 = vld [vmem:[#allocation2 + $0x8] sm:$0x3]
    %s138 = scalar_lea.vmem [#allocation2], 32
    %v139 = vld [vmem:[%s138] sm:$0x3]
    %v140 = vld [vmem:[%s138 + $0x8] sm:$0x3]
    %v141 = vmul.f32 %v136, %v139
    %v142 = vmul.f32 %v137, %v140
    %v143 = vsel %vm30, %v141, 0.0
    %v144 = vrot.slane %v143, 4
    %v145 = vadd.f32 %v143, %v144
    %v146 = vrot.slane %v145, 2
    %v147 = vadd.f32 %v145, %v146
    %v148 = vrot.slane %v147, 1
    %v149 = vadd.f32 %v147, %v148
    %v150 = vsel %vm30, %v142, 0.0
    %v151 = vrot.slane %v150, 4
    %v152 = vadd.f32 %v150, %v151
    %v153 = vrot.slane %v152, 2
    %v154 = vadd.f32 %v152, %v153
    %v155 = vrot.slane %v154, 1
    %v156 = vadd.f32 %v154, %v155
    %v157 = vld [vmem:[#allocation2] sm:$0xc]
    %v158 = vld [vmem:[#allocation2 + $0x8] sm:$0xc]
    %v159 = vld [vmem:[%s138] sm:$0xc]
    %v160 = vld [vmem:[%s138 + $0x8] sm:$0xc]
    %v161 = vmul.f32 %v157, %v159
    %v162 = vmul.f32 %v158, %v160
    %v165 = vrot.slane %v161, 2
    %v166 = vrot.slane %v162, 2
    %v169 = vsel %vm30, %v165, 0.0
    %v170 = vrot.slane %v169, 4
    %v171 = vadd.f32 %v169, %v170
    %v172 = vrot.slane %v171, 2
    %v173 = vadd.f32 %v171, %v172
    %v174 = vrot.slane %v173, 1
    %v175 = vadd.f32 %v173, %v174
    %v176 = vsel %vm30, %v166, 0.0
    %v177 = vrot.slane %v176, 4
    %v178 = vadd.f32 %v176, %v177
    %v179 = vrot.slane %v178, 2
    %v180 = vadd.f32 %v178, %v179
    %v181 = vrot.slane %v180, 1
    %v182 = vadd.f32 %v180, %v181
    %v183 = vld [vmem:[#allocation2] sm:$0x30]
    %v184 = vld [vmem:[#allocation2 + $0x8] sm:$0x30]
    %v185 = vld [vmem:[%s138] sm:$0x30]
    %v186 = vld [vmem:[%s138 + $0x8] sm:$0x30]
    %v187 = vmul.f32 %v183, %v185
    %v188 = vmul.f32 %v184, %v186
    %v191 = vrot.slane %v187, 4
    %v192 = vrot.slane %v188, 4
    %v195 = vsel %vm30, %v191, 0.0
    %v196 = vrot.slane %v195, 4
    %v197 = vadd.f32 %v195, %v196
    %v198 = vrot.slane %v197, 2
    %v199 = vadd.f32 %v197, %v198
    %v200 = vrot.slane %v199, 1
    %v201 = vadd.f32 %v199, %v200
    %v202 = vsel %vm30, %v192, 0.0
    %v203 = vrot.slane %v202, 4
    %v204 = vadd.f32 %v202, %v203
    %v205 = vrot.slane %v204, 2
    %v206 = vadd.f32 %v204, %v205
    %v207 = vrot.slane %v206, 1
    %v208 = vadd.f32 %v206, %v207
    %v209 = vld [vmem:[#allocation2] sm:$0xc0]
    %v210 = vld [vmem:[#allocation2 + $0x8] sm:$0xc0]
    %v211 = vld [vmem:[%s138] sm:$0xc0]
    %v212 = vld [vmem:[%s138 + $0x8] sm:$0xc0]
    %v213 = vmul.f32 %v209, %v211
    %v214 = vmul.f32 %v210, %v212
    %v217 = vrot.slane %v213, 6
    %v218 = vrot.slane %v214, 6
    %v221 = vsel %vm30, %v217, 0.0
    %v222 = vrot.slane %v221, 4
    %v223 = vadd.f32 %v221, %v222
    %v224 = vrot.slane %v223, 2
    %v225 = vadd.f32 %v223, %v224
    %v226 = vrot.slane %v225, 1
    %v227 = vadd.f32 %v225, %v226
    %v228 = vsel %vm30, %v218, 0.0
    %v229 = vrot.slane %v228, 4
    %v230 = vadd.f32 %v228, %v229
    %v231 = vrot.slane %v230, 2
    %v232 = vadd.f32 %v230, %v231
    %v233 = vrot.slane %v232, 1
    %v234 = vadd.f32 %v232, %v233
    %v235 = vsel %vm123, %v149, %v175
    %v236 = vsel %vm123, %v156, %v182
    %v237 = vsel %vm30, %v235, %v201
    %v238 = vsel %vm30, %v236, %v208
    %v239 = vsel %vm128, %v237, %v227
    %v240 = vsel %vm128, %v238, %v234
    %v243 = vcombine.low %v239, %v240
    %s245 = scalar_lea.vmem [#allocation5], 8
    %246 = vst [vmem:[%s245] sm:$0xff] %v243
    // Predicated region
    $region10: #{tpu_custom_call.1} parent=1 // pred_check
      _
    $region11: #{tpu_custom_call.1} parent=1 // pred_check_branch
      %248 = sbr.rel (0) target = $region13
    $region12: #{tpu_custom_call.1} parent=1 // pred_region
      %s250 = ssub.s32 256, 256
      %251 = vsyncadd [#allocation4], %s250
      %s252 = sshll.u32 [#allocation5], 4
      %s253 = int_to_ptr.vmem [resolvable:$true] %s252
      %258 = dma.vmem_to_hbm [thread:$0]  %s253, 256, %s1, [#allocation4], 128, 128, 8
    $region13: #{tpu_custom_call.1} parent=1 // pred_fallthru
      _
    // Predicated region
    $region14: #{tpu_custom_call.1} parent=1 // pred_check
      _
    $region15: #{tpu_custom_call.1} parent=1 // pred_check_branch
      %260 = sbr.rel (0) target = $region17
    $region16: #{tpu_custom_call.1} parent=1 // pred_region
      %261 = dma.done [#allocation4], 256
    $region17: #{tpu_custom_call.1} parent=1 // pred_fallthru
      _
    %262 = vsyncpa [#allocation3], 1
    %263 = vsyncpa [#allocation4], 1

</llo_original>
